<compile_context>
chip_gen: v7x
topology: tpu7x:2x2x1
jax: 0.10.0
libtpu: 0.0.40
codegen_flags: <defaults>
</compile_context>

<pallas_src>
import jax
import jax.numpy as jnp
from jax import lax
from jax.experimental import pallas as pl
from jax.experimental.pallas import tpu as pltpu


def _round_up(x, m):
    return (x + m - 1) // m * m


def td3_twin_q_kernel(s_ref, a_ref, w1_ref, b1_ref, w2_ref, b2_ref,
                      w3_ref, b3_ref, out_ref):
    """One batch tile of the fused twin-critic forward pass.

    The two critics' weights are packed side-by-side (layer 1, biases, head)
    and block-diagonally (layer 2), so a single pair of matmuls evaluates both
    critics.  The 1-output heads are an elementwise mul (VPU) + masked lane
    reduce (XLU) instead of an MXU pass with N=1.  Output tile: (TB, 2) with
    lane 0 = Q1, lane 1 = Q2.
    """
    # Fused s/a concat: stays in VMEM, no (B, S+A) HBM round trip.
    x = jnp.concatenate([s_ref[...], a_ref[...]], axis=1)             # (TB, S+A)

    h1 = jnp.dot(x, w1_ref[...], preferred_element_type=jnp.float32) + b1_ref[...]
    h1 = jnp.maximum(h1, 0.0)                                         # (TB, 2H)
    h2 = jnp.dot(h1, w2_ref[...], preferred_element_type=jnp.float32) + b2_ref[...]
    h2 = jnp.maximum(h2, 0.0)                                         # (TB, 2H)

    # Per-critic head: prod = h2 * [w3_1 | w3_2]; segment-reduce the two halves
    # with an iota mask (full-width reduces, no misaligned lane slices).
    prod = h2 * w3_ref[...]                                           # (TB, 2H)
    h = prod.shape[-1] // 2
    lane = lax.broadcasted_iota(jnp.int32, prod.shape, 1)
    q1 = jnp.sum(jnp.where(lane < h, prod, 0.0), axis=-1, keepdims=True) + b3_ref[0]
    q2 = jnp.sum(jnp.where(lane >= h, prod, 0.0), axis=-1, keepdims=True) + b3_ref[1]
    out_ref[...] = jnp.concatenate([q1, q2], axis=-1).astype(out_ref.dtype)


def td3_forward(s, a, params_1, params_2, *, block_b=8192):
    """(Q1(s,a), Q2(s,a)) -> two (batch, 1) arrays, matching TD3.forward."""
    assert s.ndim == 2 and a.ndim == 2 and s.shape[0] == a.shape[0]
    batch, state_size = s.shape
    action_size = a.shape[1]

    w1_1, b1_1, w2_1, b2_1, w3_1, b3_1 = params_1
    w1_2, b1_2, w2_2, b2_2, w3_2, b3_2 = params_2
    hidden = w1_1.shape[1]
    # Output biases must be rank-1 (shape (1,)) so the SMEM packing below works.
    assert b3_1.shape == (1,) and b3_2.shape == (1,), (b3_1.shape, b3_2.shape)

    # ---- Pack the two critics into one fused parameter set (tiny arrays). ----
    w1p = jnp.concatenate([w1_1, w1_2], axis=1)                        # (S+A, 2H)
    b1p = jnp.concatenate([b1_1, b1_2], axis=1)                        # (1, 2H)
    z = jnp.zeros((hidden, hidden), w2_1.dtype)
    w2p = jnp.concatenate([jnp.concatenate([w2_1, z], axis=1),
                           jnp.concatenate([z, w2_2], axis=1)], axis=0)  # (2H, 2H)
    b2p = jnp.concatenate([b2_1, b2_2], axis=1)                        # (1, 2H)
    w3p = jnp.concatenate([w3_1, w3_2], axis=1)                        # (1, 2H)
    b3p = jnp.concatenate([b3_1, b3_2], axis=0)                        # (2,) -> SMEM

    # ---- Batch tiling: big tiles, and >=2 grid steps for large batches so the
    # "parallel" axis can shard across v7x's 2 TensorCores. ----
    if batch <= 1024:
        tb = _round_up(batch, 8)
    else:
        n_steps = max(2, pl.cdiv(batch, block_b))
        tb = _round_up(pl.cdiv(batch, n_steps), 8)
    grid_n = pl.cdiv(batch, tb)   # ragged last tile handled by Pallas (no jnp.pad)

    # ---- Scoped-VMEM budget: double-buffered s/a/out streams + live f32
    # activation temporaries (x, h1, h2, prod) + headroom for weights/misc. ----
    io_row_bytes = (state_size + action_size + 2) * 4
    tmp_row_bytes = (state_size + action_size + 3 * 2 * hidden + 8) * 4
    vmem_limit = min(96 * 1024 * 1024,
                     max(32 * 1024 * 1024,
                         int(tb * (2 * io_row_bytes + tmp_row_bytes))
                         + 4 * 1024 * 1024))

    def tiled(feat):
        # Batch-tiled activation / output stream.
        return pl.BlockSpec((tb, feat), lambda i: (i, 0))

    def resident(arr):
        # Whole-array block, constant index map -> stays VMEM-resident. The
        # fused weights are tiny (<=(2H)^2 f32), so default buffering is fine.
        return pl.BlockSpec(arr.shape, lambda i: (0,) * arr.ndim)

    smem_spec = pl.BlockSpec(memory_space=pltpu.MemorySpace.SMEM)

    out = pl.pallas_call(
        td3_twin_q_kernel,
        out_shape=jax.ShapeDtypeStruct((batch, 2), jnp.float32),
        grid=(grid_n,),
        in_specs=[tiled(state_size), tiled(action_size),
                  resident(w1p), resident(b1p), resident(w2p),
                  resident(b2p), resident(w3p), smem_spec],
        out_specs=pl.BlockSpec((tb, 2), lambda i: (i, 0)),
        compiler_params=pltpu.CompilerParams(
            dimension_semantics=("parallel",),
            vmem_limit_bytes=vmem_limit),
    )(s, a, w1p, b1p, w2p, b2p, w3p, b3p)

    return out[:, 0:1], out[:, 1:2]


def init_critic_params(key, state_size, action_size, hidden):
    """Deterministic synthetic init of one value MLP (shapes as in _make_value_module)."""
    ks = jax.random.split(key, 6)
    w1 = jax.random.normal(ks[0], (state_size + action_size, hidden), jnp.float32) * 0.1
    b1 = jax.random.normal(ks[1], (1, hidden), jnp.float32) * 0.1
    w2 = jax.random.normal(ks[2], (hidden, hidden), jnp.float32) * 0.1
    b2 = jax.random.normal(ks[3], (1, hidden), jnp.float32) * 0.1
    w3 = jax.random.normal(ks[4], (1, hidden), jnp.float32) * 0.1   # row vector (1, H)
    b3 = jax.random.normal(ks[5], (1,), jnp.float32) * 0.1          # scalar bias (1,)
    return (w1, b1, w2, b2, w3, b3)


def td3_forward_ref(s, a, params_1, params_2):
    """Pure-JAX reference of the same twin-critic forward pass."""
    x = jnp.concatenate([s, a], axis=1)

    def critic(p):
        w1, b1, w2, b2, w3, b3 = p
        h1 = jnp.maximum(x @ w1 + b1, 0.0)
        h2 = jnp.maximum(h1 @ w2 + b2, 0.0)
        return h2 @ w3.T + b3

    return critic(params_1), critic(params_2)


if __name__ == "__main__":
    # Small shapes consistent with the module: state=8, action=4, hidden=32.
    state_size, action_size, hidden = 8, 4, 32
    key = jax.random.PRNGKey(0)
    k_s, k_a, k_p1, k_p2 = jax.random.split(key, 4)
    params_1 = init_critic_params(k_p1, state_size, action_size, hidden)
    params_2 = init_critic_params(k_p2, state_size, action_size, hidden)

    # --- tiny-batch check (single tile) ---
    batch = 8
    s = jax.random.normal(k_s, (batch, state_size), jnp.float32)
    a = jax.random.normal(k_a, (batch, action_size), jnp.float32)
    q1, q2 = jax.block_until_ready(td3_forward(s, a, params_1, params_2))
    q1_ref, q2_ref = td3_forward_ref(s, a, params_1, params_2)
    assert q1.shape == (batch, 1), q1.shape
    assert q2.shape == (batch, 1), q2.shape
    assert jnp.allclose(q1, q1_ref, atol=1e-4, rtol=1e-4)
    assert jnp.allclose(q2, q2_ref, atol=1e-4, rtol=1e-4)

    # --- multi-step grid with a ragged last tile (no-pad path, >=2 steps) ---
    batch2 = 2500
    k_s2, k_a2 = jax.random.split(jax.random.PRNGKey(1), 2)
    s2 = jax.random.normal(k_s2, (batch2, state_size), jnp.float32)
    a2 = jax.random.normal(k_a2, (batch2, action_size), jnp.float32)
    q1b, q2b = jax.block_until_ready(
        td3_forward(s2, a2, params_1, params_2, block_b=1024))
    q1b_ref, q2b_ref = td3_forward_ref(s2, a2, params_1, params_2)
    assert q1b.shape == (batch2, 1) and q2b.shape == (batch2, 1)
    assert jnp.allclose(q1b, q1b_ref, atol=1e-4, rtol=1e-4)
    assert jnp.allclose(q2b, q2b_ref, atol=1e-4, rtol=1e-4)

    print("KERNEL_OK")
</pallas_src>

<mosaic_0001>
module attributes {stable_mosaic.version = 11 : i64} {
  func.func @td3_twin_q_kernel(%arg0: i32, %arg1: memref<8x8xf32, #tpu.memory_space<vmem>>, %arg2: memref<8x4xf32, #tpu.memory_space<vmem>>, %arg3: memref<12x64xf32, #tpu.memory_space<vmem>>, %arg4: memref<1x64xf32, #tpu.memory_space<vmem>>, %arg5: memref<64x64xf32, #tpu.memory_space<vmem>>, %arg6: memref<1x64xf32, #tpu.memory_space<vmem>>, %arg7: memref<1x64xf32, #tpu.memory_space<vmem>>, %arg8: memref<2xf32, #tpu.memory_space<smem>>, %arg9: memref<8x2xf32, #tpu.memory_space<vmem>>) attributes {dimension_semantics = [#tpu.dimension_semantics<parallel>], iteration_bounds = array<i64: 1>, scalar_prefetch = 0 : i64, scratch_operands = 0 : i64, tpu.core_type = #tpu.core_type<tc>, window_params = [{transform_indices = @transform_0, window_bounds = array<i64: 8, 8>}, {transform_indices = @transform_1, window_bounds = array<i64: 8, 4>}, {pipeline_mode = #tpu.pipeline_mode<synchronous>, transform_indices = @transform_2, window_bounds = array<i64: 12, 64>}, {pipeline_mode = #tpu.pipeline_mode<synchronous>, transform_indices = @transform_3, window_bounds = array<i64: 1, 64>}, {pipeline_mode = #tpu.pipeline_mode<synchronous>, transform_indices = @transform_4, window_bounds = array<i64: 64, 64>}, {pipeline_mode = #tpu.pipeline_mode<synchronous>, transform_indices = @transform_5, window_bounds = array<i64: 1, 64>}, {pipeline_mode = #tpu.pipeline_mode<synchronous>, transform_indices = @transform_6, window_bounds = array<i64: 1, 64>}, {transform_indices = @transform_7, window_bounds = array<i64: 2>}, {transform_indices = @transform_8, window_bounds = array<i64: 8, 2>}]} {
    %c0 = arith.constant 0 : index
    %c0_0 = arith.constant 0 : index
    %0 = vector.load %arg1[%c0, %c0_0] : memref<8x8xf32, #tpu.memory_space<vmem>>, vector<8x8xf32>
    %c0_1 = arith.constant 0 : index
    %c0_2 = arith.constant 0 : index
    %1 = vector.load %arg2[%c0_1, %c0_2] : memref<8x4xf32, #tpu.memory_space<vmem>>, vector<8x4xf32>
    %2 = tpu.concatenate %0, %1 in 1 : vector<8x8xf32>, vector<8x4xf32> -> vector<8x12xf32>
    %c0_3 = arith.constant 0 : index
    %c0_4 = arith.constant 0 : index
    %3 = vector.load %arg3[%c0_3, %c0_4] : memref<12x64xf32, #tpu.memory_space<vmem>>, vector<12x64xf32>
    %cst = arith.constant dense<0.000000e+00> : vector<8x64xf32>
    %4 = tpu.matmul %2, %3, %cst {dimension_numbers = #tpu.dot_dimension_numbers<[1], [0], [0], [1], [0, 0, 1, 1], [], []>} : vector<8x12xf32>, vector<12x64xf32>, vector<8x64xf32> -> vector<8x64xf32>
    %c0_5 = arith.constant 0 : index
    %c0_6 = arith.constant 0 : index
    %5 = vector.load %arg4[%c0_5, %c0_6] : memref<1x64xf32, #tpu.memory_space<vmem>>, vector<1x64xf32>
    %6 = vector.broadcast %5 : vector<1x64xf32> to vector<8x64xf32>
    %7 = arith.addf %4, %6 : vector<8x64xf32>
    %cst_7 = arith.constant 0.000000e+00 : f32
    %8 = vector.broadcast %cst_7 : f32 to vector<8x64xf32>
    %9 = arith.maximumf %7, %8 : vector<8x64xf32>
    %c0_8 = arith.constant 0 : index
    %c0_9 = arith.constant 0 : index
    %10 = vector.load %arg5[%c0_8, %c0_9] : memref<64x64xf32, #tpu.memory_space<vmem>>, vector<64x64xf32>
    %cst_10 = arith.constant dense<0.000000e+00> : vector<8x64xf32>
    %11 = tpu.matmul %9, %10, %cst_10 {dimension_numbers = #tpu.dot_dimension_numbers<[1], [0], [0], [1], [0, 0, 1, 1], [], []>} : vector<8x64xf32>, vector<64x64xf32>, vector<8x64xf32> -> vector<8x64xf32>
    %c0_11 = arith.constant 0 : index
    %c0_12 = arith.constant 0 : index
    %12 = vector.load %arg6[%c0_11, %c0_12] : memref<1x64xf32, #tpu.memory_space<vmem>>, vector<1x64xf32>
    %13 = vector.broadcast %12 : vector<1x64xf32> to vector<8x64xf32>
    %14 = arith.addf %11, %13 : vector<8x64xf32>
    %cst_13 = arith.constant 0.000000e+00 : f32
    %15 = vector.broadcast %cst_13 : f32 to vector<8x64xf32>
    %16 = arith.maximumf %14, %15 : vector<8x64xf32>
    %c0_14 = arith.constant 0 : index
    %c0_15 = arith.constant 0 : index
    %17 = vector.load %arg7[%c0_14, %c0_15] : memref<1x64xf32, #tpu.memory_space<vmem>>, vector<1x64xf32>
    %18 = vector.broadcast %17 : vector<1x64xf32> to vector<8x64xf32>
    %19 = arith.mulf %16, %18 : vector<8x64xf32>
    %20 = tpu.iota {dimensions = array<i32: 1>} : vector<8x64xi32>
    %c32_i32 = arith.constant 32 : i32
    %21 = vector.broadcast %c32_i32 : i32 to vector<8x64xi32>
    %22 = arith.cmpi slt, %20, %21 : vector<8x64xi32>
    %cst_16 = arith.constant 0.000000e+00 : f32
    %23 = vector.broadcast %cst_16 : f32 to vector<8x64xf32>
    %24 = arith.select %22, %19, %23 : vector<8x64xi1>, vector<8x64xf32>
    %cst_17 = arith.constant dense<0.000000e+00> : vector<8xf32>
    %25 = vector.multi_reduction <add>, %24, %cst_17 [1] : vector<8x64xf32> to vector<8xf32>
    %26 = vector.shape_cast %25 : vector<8xf32> to vector<8x1xf32>
    %c0_18 = arith.constant 0 : index
    %27 = memref.load %arg8[%c0_18] : memref<2xf32, #tpu.memory_space<smem>>
    %28 = vector.broadcast %27 : f32 to vector<8x1xf32>
    %29 = arith.addf %26, %28 : vector<8x1xf32>
    %c32_i32_19 = arith.constant 32 : i32
    %30 = vector.broadcast %c32_i32_19 : i32 to vector<8x64xi32>
    %31 = arith.cmpi sge, %20, %30 : vector<8x64xi32>
    %cst_20 = arith.constant 0.000000e+00 : f32
    %32 = vector.broadcast %cst_20 : f32 to vector<8x64xf32>
    %33 = arith.select %31, %19, %32 : vector<8x64xi1>, vector<8x64xf32>
    %cst_21 = arith.constant dense<0.000000e+00> : vector<8xf32>
    %34 = vector.multi_reduction <add>, %33, %cst_21 [1] : vector<8x64xf32> to vector<8xf32>
    %35 = vector.shape_cast %34 : vector<8xf32> to vector<8x1xf32>
    %c1 = arith.constant 1 : index
    %36 = memref.load %arg8[%c1] : memref<2xf32, #tpu.memory_space<smem>>
    %37 = vector.broadcast %36 : f32 to vector<8x1xf32>
    %38 = arith.addf %35, %37 : vector<8x1xf32>
    %39 = tpu.concatenate %29, %38 in 1 : vector<8x1xf32>, vector<8x1xf32> -> vector<8x2xf32>
    %c0_22 = arith.constant 0 : index
    %c0_23 = arith.constant 0 : index
    %40 = vector.load %arg9[%c0_22, %c0_23] : memref<8x2xf32, #tpu.memory_space<vmem>>, vector<8x2xf32>
    tpu.vector_store %arg9[%c0_22, %c0_23], %39 {strides = array<i32>} : memref<8x2xf32, #tpu.memory_space<vmem>>, vector<8x2xf32>,
    return
  }
  func.func @transform_0(%arg0: i32) -> (i32, i32) {
    %c0_i32 = arith.constant 0 : i32
    %c0_i32_0 = arith.constant 0 : i32
    return %arg0, %c0_i32 : i32, i32
  }
  func.func @transform_1(%arg0: i32) -> (i32, i32) {
    %c0_i32 = arith.constant 0 : i32
    %c0_i32_0 = arith.constant 0 : i32
    return %arg0, %c0_i32 : i32, i32
  }
  func.func @transform_2(%arg0: i32) -> (i32, i32) {
    %c0_i32 = arith.constant 0 : i32
    %c0_i32_0 = arith.constant 0 : i32
    %c0_i32_1 = arith.constant 0 : i32
    return %c0_i32, %c0_i32_0 : i32, i32
  }
  func.func @transform_3(%arg0: i32) -> (i32, i32) {
    %c0_i32 = arith.constant 0 : i32
    %c0_i32_0 = arith.constant 0 : i32
    %c0_i32_1 = arith.constant 0 : i32
    return %c0_i32, %c0_i32_0 : i32, i32
  }
  func.func @transform_4(%arg0: i32) -> (i32, i32) {
    %c0_i32 = arith.constant 0 : i32
    %c0_i32_0 = arith.constant 0 : i32
    %c0_i32_1 = arith.constant 0 : i32
    return %c0_i32, %c0_i32_0 : i32, i32
  }
  func.func @transform_5(%arg0: i32) -> (i32, i32) {
    %c0_i32 = arith.constant 0 : i32
    %c0_i32_0 = arith.constant 0 : i32
    %c0_i32_1 = arith.constant 0 : i32
    return %c0_i32, %c0_i32_0 : i32, i32
  }
  func.func @transform_6(%arg0: i32) -> (i32, i32) {
    %c0_i32 = arith.constant 0 : i32
    %c0_i32_0 = arith.constant 0 : i32
    %c0_i32_1 = arith.constant 0 : i32
    return %c0_i32, %c0_i32_0 : i32, i32
  }
  func.func @transform_7(%arg0: i32) -> i32 {
    %c0_i32 = arith.constant 0 : i32
    %c0_i32_0 = arith.constant 0 : i32
    return %c0_i32 : i32
  }
  func.func @transform_8(%arg0: i32) -> (i32, i32) {
    %c0_i32 = arith.constant 0 : i32
    %c0_i32_0 = arith.constant 0 : i32
    return %arg0, %c0_i32 : i32, i32
  }
}

</mosaic_0001>

<llo_original>
// kernel: tpu_custom_call.1
$region0: #{tpu_custom_call.1}
  #allocation0 [shape = 'u32[]', space=smem, size = 0x4, offset = 0x4, fixed_abs, tag = 'smem constant byte address 0x4 - core index']
  #allocation1 [shape = 'u32[144,128]{1,0:T(1,128)}', space=vmem, size = 0x12000, scoped, tag = 'internal scratch']
  %s0 = inlined_call_operand.hbm [shape: f32[8,8], index: 0, kind: input, shape index: {}]
  %s1 = inlined_call_operand.vmem [shape: f32[8,4], index: 1, kind: input, shape index: {}]
  %s2 = inlined_call_operand.vmem [shape: f32[12,64], index: 2, kind: input, shape index: {}]
  %s3 = inlined_call_operand.vmem [shape: f32[1,64], index: 3, kind: input, shape index: {}]
  %s4 = inlined_call_operand.hbm [shape: f32[64,64], index: 4, kind: input, shape index: {}]
  %s5 = inlined_call_operand.vmem [shape: f32[1,64], index: 5, kind: input, shape index: {}]
  %s6 = inlined_call_operand.vmem [shape: f32[1,64], index: 6, kind: input, shape index: {}]
  %s7 = inlined_call_operand.vmem [shape: f32[2], index: 7, kind: input, shape index: {}]
  %s8 = inlined_call_operand.vmem [shape: f32[8,2], index: 8, kind: output, shape index: {}]
  %s9 = sld [smem:[#allocation0]]
  $region54: #{tpu_custom_call.1} parent=0
    _
  %s11 = ssub.s32 1, %s9
  %s12 = scalar_select 0, %s11, %s9
  $region1: #{tpu_custom_call.1} parent=0
    #allocation2 [shape = 'u8[4096]{0}', space=vmem, size = 0x1000, scoped, tag = 'input window, operand 0, single buffered']
    #allocation3 [shape = 's32[1]{0}', space=sflag, size = 0x4, scoped, tag = 'scoped memory for tpu_custom_call.1']
    #allocation4 [shape = 's32[1]{0}', space=sflag, size = 0x4, scoped, tag = 'scoped memory for tpu_custom_call.1']
    #allocation5 [shape = 'u8[32768]{0}', space=vmem, size = 0x8000, scoped, tag = 'input window, operand 4, single buffered']
    #allocation6 [shape = 's32[1]{0}', space=sflag, size = 0x4, scoped, tag = 'scoped memory for tpu_custom_call.1']
    #allocation7 [shape = 'u8[512]{0}', space=smem, size = 0x200, scoped, tag = 'input window, operand 7, single buffered']
    %13 = vsyncpa [#allocation3], 0
    %14 = vsyncpa [#allocation6], 0
    %15 = vsyncpa [#allocation4], 0
    // Predicated region
    $region2: #{tpu_custom_call.1} parent=1 // pred_check
      _
    $region3: #{tpu_custom_call.1} parent=1 // pred_check_branch
      %17 = sbr.rel (0) target = $region5
    $region4: #{tpu_custom_call.1} parent=1 // pred_region
      %s19 = ssub.s32 128, 128
      %20 = vsyncadd [#allocation3], %s19
      %s22 = sshll.u32 [#allocation2], 4
      %s23 = int_to_ptr.vmem [resolvable:$true] %s22
      %25 = dma.hbm_to_vmem [thread:$0]  %s0, 128, %s23, [#allocation3]
    $region5: #{tpu_custom_call.1} parent=1 // pred_fallthru
      _
    // Predicated region
    $region6: #{tpu_custom_call.1} parent=1 // pred_check
      _
    $region7: #{tpu_custom_call.1} parent=1 // pred_check_branch
      %27 = sbr.rel (0) target = $region9
    $region8: #{tpu_custom_call.1} parent=1 // pred_region
      _
    $region9: #{tpu_custom_call.1} parent=1 // pred_fallthru
      _
    // Predicated region
    $region10: #{tpu_custom_call.1} parent=1 // pred_check
      _
    $region11: #{tpu_custom_call.1} parent=1 // pred_check_branch
      %29 = sbr.rel (0) target = $region13
    $region12: #{tpu_custom_call.1} parent=1 // pred_region
      _
    $region13: #{tpu_custom_call.1} parent=1 // pred_fallthru
      _
    // Predicated region
    $region14: #{tpu_custom_call.1} parent=1 // pred_check
      _
    $region15: #{tpu_custom_call.1} parent=1 // pred_check_branch
      %31 = sbr.rel (0) target = $region17
    $region16: #{tpu_custom_call.1} parent=1 // pred_region
      _
    $region17: #{tpu_custom_call.1} parent=1 // pred_fallthru
      _
    // Predicated region
    $region18: #{tpu_custom_call.1} parent=1 // pred_check
      _
    $region19: #{tpu_custom_call.1} parent=1 // pred_check_branch
      %33 = sbr.rel (0) target = $region21
    $region20: #{tpu_custom_call.1} parent=1 // pred_region
      %s35 = ssub.s32 1024, 1024
      %36 = vsyncadd [#allocation6], %s35
      %s37 = sshll.u32 [#allocation5], 4
      %s38 = int_to_ptr.vmem [resolvable:$true] %s37
      %43 = dma.hbm_to_vmem [thread:$0]  %s4, 1024, %s38, [#allocation6], 128, 128, 8
    $region21: #{tpu_custom_call.1} parent=1 // pred_fallthru
      _
    // Predicated region
    $region22: #{tpu_custom_call.1} parent=1 // pred_check
      _
    $region23: #{tpu_custom_call.1} parent=1 // pred_check_branch
      %45 = sbr.rel (0) target = $region25
    $region24: #{tpu_custom_call.1} parent=1 // pred_region
      _
    $region25: #{tpu_custom_call.1} parent=1 // pred_fallthru
      _
    // Predicated region
    $region26: #{tpu_custom_call.1} parent=1 // pred_check
      _
    $region27: #{tpu_custom_call.1} parent=1 // pred_check_branch
      %47 = sbr.rel (0) target = $region29
    $region28: #{tpu_custom_call.1} parent=1 // pred_region
      _
    $region29: #{tpu_custom_call.1} parent=1 // pred_fallthru
      _
    // Predicated region
    $region30: #{tpu_custom_call.1} parent=1 // pred_check
      _
    $region31: #{tpu_custom_call.1} parent=1 // pred_check_branch
      %49 = sbr.rel (0) target = $region33
    $region32: #{tpu_custom_call.1} parent=1 // pred_region
      %s51 = ssub.s32 16, 16
      %52 = vsyncadd [#allocation4], %s51
      %s54 = sshll.u32 %s7, 4
      %s55 = int_to_ptr.vmem [resolvable:$true] %s54
      %57 = dma.vmem_to_smem %s55, 16, [#allocation7], [#allocation4]
    $region33: #{tpu_custom_call.1} parent=1 // pred_fallthru
      _
    // Predicated region
    $region34: #{tpu_custom_call.1} parent=1 // pred_check
      _
    $region35: #{tpu_custom_call.1} parent=1 // pred_check_branch
      %59 = sbr.rel (0) target = $region37
    $region36: #{tpu_custom_call.1} parent=1 // pred_region
      %60 = dma.done [#allocation3], 128
    $region37: #{tpu_custom_call.1} parent=1 // pred_fallthru
      _
    // Predicated region
    $region38: #{tpu_custom_call.1} parent=1 // pred_check
      _
    $region39: #{tpu_custom_call.1} parent=1 // pred_check_branch
      %62 = sbr.rel (0) target = $region41
    $region40: #{tpu_custom_call.1} parent=1 // pred_region
      %63 = dma.done [#allocation6], 1024
    $region41: #{tpu_custom_call.1} parent=1 // pred_fallthru
      _
    // Predicated region
    $region42: #{tpu_custom_call.1} parent=1 // pred_check
      _
    $region43: #{tpu_custom_call.1} parent=1 // pred_check_branch
      %65 = sbr.rel (0) target = $region45
    $region44: #{tpu_custom_call.1} parent=1 // pred_region
      %66 = dma.done [#allocation4], 16
    $region45: #{tpu_custom_call.1} parent=1 // pred_fallthru
      _
    %67 = sfence
    %v68 = vld [vmem:[#allocation2] sm:$0xff]
    %v69 = vld [vmem:[%s1] sm:$0xff]
    %71 = vrot.lane.b32.xlu0 %v69, 8
    %v72 = vpop.permute.xlu0 %71
    %vm74 = vcmask 64512
    %v75 = vsel %vm74, %v68, %v72
    %v76 = vld [vmem:[%s2] sm:$0xff]
    %v77 = vld [vmem:[%s2 + $0x8] sm:$0xf]
    %v78 = vld [vmem:[%s3] sm:$0x1]
    %v80 = vlaneseq
    %v81 = vshrl.u32 %v80, 7
    %v82 = vsub.s32 0, %v81
    %v83 = vrot.slane %v78, %v82
    %vm85 = vcmask 97280
    %v87 = vsel %vm85, %v75, 0
    %vm89 = vcmask 1043456
    %v91 = vsel %vm89, %v77, 0
    %93 = vmatprep.subr.mxu0 0.0
    %94 = vmatpush1.msra.mxu0 %v76
    %95 = vmatprep.subr.mxu0 0.0
    %96 = vmatpush1.msra.mxu0 %v91
    %97 = vmatprep.subr.mxu0 0.0
    %98 = vmatpush1.msra.mxu0 0.0
    %99 = vmatprep.subr.mxu0 0.0
    %100 = vmatpush1.msra.mxu0 0.0
    %101 = vmatprep.subr.mxu0 0.0
    %102 = vmatpush1.msra.mxu0 0.0
    %103 = vmatprep.subr.mxu0 0.0
    %104 = vmatpush1.msra.mxu0 0.0
    %105 = vmatprep.subr.mxu0 0.0
    %106 = vmatpush1.msra.mxu0 0.0
    %107 = vmatprep.subr.mxu0 0.0
    %108 = vmatpush1.msra.mxu0 0.0
    %109 = vmatprep.subr.mxu0 0.0
    %110 = vmatpush1.msra.mxu0 0.0
    %111 = vmatprep.subr.mxu0 0.0
    %112 = vmatpush1.msra.mxu0 0.0
    %113 = vmatprep.subr.mxu0 0.0
    %114 = vmatpush1.msra.mxu0 0.0
    %115 = vmatprep.subr.mxu0 0.0
    %116 = vmatpush1.msra.mxu0 0.0
    %117 = vmatprep.subr.mxu0 0.0
    %118 = vmatpush1.msra.mxu0 0.0
    %119 = vmatprep.subr.mxu0 0.0
    %120 = vmatpush1.msra.mxu0 0.0
    %121 = vmatprep.subr.mxu0 0.0
    %122 = vmatpush1.msra.mxu0 0.0
    %123 = vmatprep.subr.mxu0 0.0
    %124 = vmatpush1.msra.mxu0 0.0
    %125 = vmatprep.subr.mxu0 0.0
    %126 = vmatpush1.msra.mxu0 0.0
    %127 = vmatprep.subr.mxu0 0.0
    %128 = vmatpush1.msra.mxu0 0.0
    %129 = vmatprep.subr.mxu0 0.0
    %130 = vmatpush1.msra.mxu0 0.0
    %131 = vmatprep.subr.mxu0 0.0
    %132 = vmatpush1.msra.mxu0 0.0
    %133 = vmatprep.subr.mxu0 0.0
    %134 = vmatpush1.msra.mxu0 0.0
    %135 = vmatprep.subr.mxu0 0.0
    %136 = vmatpush1.msra.mxu0 0.0
    %137 = vmatprep.subr.mxu0 0.0
    %138 = vmatpush1.msra.mxu0 0.0
    %139 = vmatprep.subr.mxu0 0.0
    %140 = vmatpush1.msra.mxu0 0.0
    %141 = vmatprep.subr.mxu0 0.0
    %142 = vmatpush1.msra.mxu0 0.0
    %143 = vmatprep.subr.mxu0 0.0
    %144 = vmatpush1.msra.mxu0 0.0
    %145 = vmatprep.subr.mxu0 0.0
    %146 = vmatpush1.msra.mxu0 0.0
    %147 = vmatprep.subr.mxu0 0.0
    %148 = vmatpush1.msra.mxu0 0.0
    %149 = vmatprep.subr.mxu0 0.0
    %150 = vmatpush1.msra.mxu0 0.0
    %151 = vmatprep.subr.mxu0 0.0
    %152 = vmatpush1.msra.mxu0 0.0
    %153 = vmatprep.subr.mxu0 0.0
    %154 = vmatpush1.msra.mxu0 0.0
    %155 = vmatprep.subr.mxu0 0.0
    %156 = vmatpush1.msra.mxu0 0.0
    %157 = vmatprep.mubr.f32.mxu0 0.0
    %158 = vmatmul.mubr.f32.gmra.mrb[0].mxu0 %v87
    %v159 = vpop.f32.mrb[0].mxu0
    %v160 = vadd.f32 %v83, %v159
    %v161 = vpop.f32.mrb[0].mxu0
    %162 = vdwg.mxu0
    %v163 = vmax.f32 %v160, 0.0
    %v164 = vld [vmem:[#allocation5] sm:$0xff]
    %v165 = vld [vmem:[#allocation5 + $0x8] sm:$0xff]
    %v166 = vld [vmem:[#allocation5 + $0x10] sm:$0xff]
    %v167 = vld [vmem:[#allocation5 + $0x18] sm:$0xff]
    %v168 = vld [vmem:[#allocation5 + $0x20] sm:$0xff]
    %v169 = vld [vmem:[#allocation5 + $0x28] sm:$0xff]
    %v170 = vld [vmem:[#allocation5 + $0x30] sm:$0xff]
    %v171 = vld [vmem:[#allocation5 + $0x38] sm:$0xff]
    %v172 = vld [vmem:[%s5] sm:$0x1]
    %v174 = vlaneseq
    %v175 = vshrl.u32 %v174, 7
    %v176 = vsub.s32 0, %v175
    %v177 = vrot.slane %v172, %v176
    %vm179 = vcmask 523264
    %v181 = vsel %vm179, %v163, 0
    %183 = vmatprep.subr.mxu0 0.0
    %184 = vmatpush1.msra.mxu0 %v164
    %185 = vmatprep.subr.mxu0 0.0
    %186 = vmatpush1.msra.mxu0 %v165
    %187 = vmatprep.subr.mxu0 0.0
    %188 = vmatpush1.msra.mxu0 %v166
    %189 = vmatprep.subr.mxu0 0.0
    %190 = vmatpush1.msra.mxu0 %v167
    %191 = vmatprep.subr.mxu0 0.0
    %192 = vmatpush1.msra.mxu0 %v168
    %193 = vmatprep.subr.mxu0 0.0
    %194 = vmatpush1.msra.mxu0 %v169
    %195 = vmatprep.subr.mxu0 0.0
    %196 = vmatpush1.msra.mxu0 %v170
    %197 = vmatprep.subr.mxu0 0.0
    %198 = vmatpush1.msra.mxu0 %v171
    %199 = vmatprep.subr.mxu0 0.0
    %200 = vmatpush1.msra.mxu0 0.0
    %201 = vmatprep.subr.mxu0 0.0
    %202 = vmatpush1.msra.mxu0 0.0
    %203 = vmatprep.subr.mxu0 0.0
    %204 = vmatpush1.msra.mxu0 0.0
    %205 = vmatprep.subr.mxu0 0.0
    %206 = vmatpush1.msra.mxu0 0.0
    %207 = vmatprep.subr.mxu0 0.0
    %208 = vmatpush1.msra.mxu0 0.0
    %209 = vmatprep.subr.mxu0 0.0
    %210 = vmatpush1.msra.mxu0 0.0
    %211 = vmatprep.subr.mxu0 0.0
    %212 = vmatpush1.msra.mxu0 0.0
    %213 = vmatprep.subr.mxu0 0.0
    %214 = vmatpush1.msra.mxu0 0.0
    %215 = vmatprep.subr.mxu0 0.0
    %216 = vmatpush1.msra.mxu0 0.0
    %217 = vmatprep.subr.mxu0 0.0
    %218 = vmatpush1.msra.mxu0 0.0
    %219 = vmatprep.subr.mxu0 0.0
    %220 = vmatpush1.msra.mxu0 0.0
    %221 = vmatprep.subr.mxu0 0.0
    %222 = vmatpush1.msra.mxu0 0.0
    %223 = vmatprep.subr.mxu0 0.0
    %224 = vmatpush1.msra.mxu0 0.0
    %225 = vmatprep.subr.mxu0 0.0
    %226 = vmatpush1.msra.mxu0 0.0
    %227 = vmatprep.subr.mxu0 0.0
    %228 = vmatpush1.msra.mxu0 0.0
    %229 = vmatprep.subr.mxu0 0.0
    %230 = vmatpush1.msra.mxu0 0.0
    %231 = vmatprep.subr.mxu0 0.0
    %232 = vmatpush1.msra.mxu0 0.0
    %233 = vmatprep.subr.mxu0 0.0
    %234 = vmatpush1.msra.mxu0 0.0
    %235 = vmatprep.subr.mxu0 0.0
    %236 = vmatpush1.msra.mxu0 0.0
    %237 = vmatprep.subr.mxu0 0.0
    %238 = vmatpush1.msra.mxu0 0.0
    %239 = vmatprep.subr.mxu0 0.0
    %240 = vmatpush1.msra.mxu0 0.0
    %241 = vmatprep.subr.mxu0 0.0
    %242 = vmatpush1.msra.mxu0 0.0
    %243 = vmatprep.subr.mxu0 0.0
    %244 = vmatpush1.msra.mxu0 0.0
    %245 = vmatprep.subr.mxu0 0.0
    %246 = vmatpush1.msra.mxu0 0.0
    %247 = vmatprep.mubr.f32.mxu0 0.0
    %248 = vmatmul.mubr.f32.gmra.mrb[0].mxu0 %v181
    %v249 = vpop.f32.mrb[0].mxu0
    %v250 = vadd.f32 %v177, %v249
    %v251 = vpop.f32.mrb[0].mxu0
    %252 = vdwg.mxu0
    %v253 = vmax.f32 %v250, 0.0
    %v254 = vld [vmem:[%s6] sm:$0x1]
    %v256 = vlaneseq
    %v257 = vshrl.u32 %v256, 7
    %v258 = vsub.s32 0, %v257
    %v259 = vrot.slane %v254, %v258
    %v261 = vmul.f32 %v253, %v259
    %v262 = vlaneseq
    %v263 = vand.u32 %v262, 127
    %vm264 = vcmp.lt.s32.totalorder %v263, 32
    %v265 = vsel %vm264, %v261, 0.0
    %v266 = vsel %vm179, %v265, 0.0
    %267 = vadd.xlane.f32.xlu0 %v266
    %v268 = vpop.xlane.xlu0 %267
    %s269 = sld [smem:[#allocation7]]
    %v270 = vstv %s269
    %v271 = vadd.f32 %v268, %v270
    %vm272 = vcmp.ge.s32.totalorder %v263, 32
    %v273 = vsel %vm272, %v261, 0.0
    %v274 = vsel %vm179, %v273, 0.0
    %275 = vadd.xlane.f32.xlu0 %v274
    %v276 = vpop.xlane.xlu0 %275
    %s277 = sld [smem:[#allocation7 + $0x1]]
    %v278 = vstv %s277
    %v279 = vadd.f32 %v276, %v278
    %vm280 = vcmask 7168
    %v281 = vsel %vm280, %v271, %v279
    %vm282 = vcmask 15360
    %283 = vst.msk [vmem:[%s8] sm:$0xff] %vm282, %v281
    // Predicated region
    $region46: #{tpu_custom_call.1} parent=1 // pred_check
      _
    $region47: #{tpu_custom_call.1} parent=1 // pred_check_branch
      %285 = sbr.rel (0) target = $region49
    $region48: #{tpu_custom_call.1} parent=1 // pred_region
      _
    $region49: #{tpu_custom_call.1} parent=1 // pred_fallthru
      _
    // Predicated region
    $region50: #{tpu_custom_call.1} parent=1 // pred_check
      _
    $region51: #{tpu_custom_call.1} parent=1 // pred_check_branch
      %287 = sbr.rel (0) target = $region53
    $region52: #{tpu_custom_call.1} parent=1 // pred_region
      _
    $region53: #{tpu_custom_call.1} parent=1 // pred_fallthru
      _
    %288 = vsyncpa [#allocation3], 1
    %289 = vsyncpa [#allocation6], 1
    %290 = vsyncpa [#allocation4], 1

</llo_original>
